<compile_context>
chip_gen: v5e
topology: v5e:2x2
jax: 0.10.0
libtpu: 0.0.40
codegen_flags: <defaults>
</compile_context>

<pallas_src>
import functools

import jax
import jax.numpy as jnp
from jax.experimental import pallas as pl
from jax.experimental.pallas import tpu as pltpu

_EPS = 1e-5
_VMEM_LIMIT = 32 * 1024 * 1024  # safe scoped limit on v5e/v6e/v7x


def _round_up(x, m):
    return ((x + m - 1) // m) * m


def _cparams(*sem):
    return pltpu.CompilerParams(dimension_semantics=tuple(sem),
                                vmem_limit_bytes=_VMEM_LIMIT)


def _approx_recip(x):
    if hasattr(pl, "reciprocal"):
        return pl.reciprocal(x, approx=True)
    return 1.0 / x


def _choose_tiles(n):
    """Return (n_pad, row_tile, k_tile). Big tiles amortize the ~0.35us per-step overhead."""
    if n < 128:
        t = _round_up(max(n, 8), 8)
        return t, t, t
    n_pad = _round_up(n, 128)
    tm = 128
    for t in (512, 256):
        if n_pad % t == 0:
            tm = t
            break
    return n_pad, tm, tm


# ----------------------------- Pallas kernels -----------------------------

def _enc_kernel(x_ref, w1_ref, b1_ref, w2_ref, b2_ref, o_ref, sum_ref, ssq_ref, *, tm, n_valid):
    """encoder Linear -> pre_mp Linear + ReLU, fused; also emits BN1 batch stats for layer 0."""
    i = pl.program_id(0)
    y = jnp.dot(x_ref[...], w1_ref[...], preferred_element_type=jnp.float32) + b1_ref[...]
    y = jnp.dot(y.astype(jnp.bfloat16), w2_ref[...],
                preferred_element_type=jnp.float32) + b2_ref[...]
    y = jnp.maximum(y, 0.0)
    o_ref[...] = y.astype(o_ref.dtype)

    rid = jax.lax.broadcasted_iota(jnp.int32, y.shape, 0) + i * tm
    ym = jnp.where(rid < n_valid, y, 0.0)        # padded rows excluded from batch stats

    @pl.when(i == 0)
    def _():
        sum_ref[...] = jnp.zeros_like(sum_ref)
        ssq_ref[...] = jnp.zeros_like(ssq_ref)

    sum_ref[...] += jnp.sum(ym, axis=0, keepdims=True)
    ssq_ref[...] += jnp.sum(ym * ym, axis=0, keepdims=True)


def encoder_premp(x, w1, b1, w2, b2, n_valid, *, tm):
    n, din = x.shape
    dmid, dout = w1.shape[1], w2.shape[1]
    return pl.pallas_call(
        functools.partial(_enc_kernel, tm=tm, n_valid=n_valid),
        out_shape=(jax.ShapeDtypeStruct((n, dout), jnp.bfloat16),
                   jax.ShapeDtypeStruct((1, dout), jnp.float32),
                   jax.ShapeDtypeStruct((1, dout), jnp.float32)),
        grid=(n // tm,),
        in_specs=[
            pl.BlockSpec((tm, din), lambda i: (i, 0)),
            pl.BlockSpec((din, dmid), lambda i: (0, 0)),
            pl.BlockSpec((1, dmid), lambda i: (0, 0)),
            pl.BlockSpec((dmid, dout), lambda i: (0, 0)),
            pl.BlockSpec((1, dout), lambda i: (0, 0)),
        ],
        out_specs=(pl.BlockSpec((tm, dout), lambda i: (i, 0)),
                   pl.BlockSpec((1, dout), lambda i: (0, 0)),
                   pl.BlockSpec((1, dout), lambda i: (0, 0))),
        compiler_params=_cparams("arbitrary"),
    )(x, w1, b1.reshape(1, dmid), w2, b2.reshape(1, dout))


def _sage_kernel(z_row_ref, a_ref, z_col_ref, inv_ref, nbr_ref, s_ref, t_ref, wlr_ref, b_ref,
                 o_ref, agg_acc):
    """Fused BN1-affine + SAGEConv(mean) + residual.

    BN1(x) = z*s + t (affine of the stored z, BN2-of-previous-layer pre-composed), so
    mean_j BN1(x)_j = ((A_cnt @ z) * inv_deg) * s + has_nbr * t, with A_cnt streamed bf16 and an
    f32 VMEM accumulator across K tiles.  lin_l/lin_r fused into a single K=2D matmul.
    """
    k = pl.program_id(1)

    @pl.when(k == 0)
    def _():
        agg_acc[...] = jnp.zeros_like(agg_acc)

    agg_acc[...] += jnp.dot(a_ref[...], z_col_ref[...], preferred_element_type=jnp.float32)

    @pl.when(k == pl.num_programs(1) - 1)
    def _():
        s = s_ref[...]
        t = t_ref[...]
        xn = z_row_ref[...].astype(jnp.float32) * s + t                 # BN1(x) for this row tile
        aggn = agg_acc[...] * inv_ref[...] * s + nbr_ref[...] * t       # mean_j BN1(x)_j
        lhs = jnp.concatenate([aggn.astype(jnp.bfloat16), xn.astype(jnp.bfloat16)], axis=-1)
        y = jnp.dot(lhs, wlr_ref[...], preferred_element_type=jnp.float32)   # K=2D MXU matmul
        y = y + b_ref[...] + xn                                          # SAGE bias + residual
        o_ref[...] = y.astype(o_ref.dtype)


def sage_conv_fused(z, a_cnt, inv_deg, nbr_ind, s, t, w_lr, b, *, tm, tk):
    n, d = z.shape
    return pl.pallas_call(
        _sage_kernel,
        out_shape=jax.ShapeDtypeStruct((n, d), jnp.bfloat16),
        grid=(n // tm, n // tk),                           # (row tiles, K tiles), K innermost
        in_specs=[
            pl.BlockSpec((tm, d), lambda i, k: (i, 0)),    # z row tile (BN1 / residual)
            pl.BlockSpec((tm, tk), lambda i, k: (i, k)),   # A_count block (bf16)
            pl.BlockSpec((tk, d), lambda i, k: (k, 0)),    # z K-block (aggregation)
            pl.BlockSpec((tm, 1), lambda i, k: (i, 0)),    # 1/deg
            pl.BlockSpec((tm, 1), lambda i, k: (i, 0)),    # has-neighbor indicator
            pl.BlockSpec((1, d), lambda i, k: (0, 0)),     # BN1 scale (on z)
            pl.BlockSpec((1, d), lambda i, k: (0, 0)),     # BN1 shift (on z)
            pl.BlockSpec((2 * d, d), lambda i, k: (0, 0)), # [lin_l ; lin_r]
            pl.BlockSpec((1, d), lambda i, k: (0, 0)),     # bias
        ],
        out_specs=pl.BlockSpec((tm, d), lambda i, k: (i, 0)),
        scratch_shapes=[pltpu.VMEM((tm, d), jnp.float32)],
        compiler_params=_cparams("parallel", "arbitrary"),
    )(z, a_cnt, z, inv_deg, nbr_ind, s, t, w_lr, b.reshape(1, d))


def _attn_kernel(h_ref, m_ref, wqkv_ref, bqkv_ref, wo_ref, bo_ref, o_ref, attn_sc,
                 *, heads, scale):
    """Per-graph exact masked softmax attention.

    Fused QKV matmul (pending BN affine pre-folded into wqkv/bqkv), all heads per grid step,
    bf16 MXU operands with f32 softmax math, head outputs written into a VMEM scratch at static
    lane offsets, fused output projection.
    """
    s_len, d = h_ref.shape
    dh = d // heads
    qkv = jnp.dot(h_ref[...], wqkv_ref[...],
                  preferred_element_type=jnp.float32) + bqkv_ref[...]   # (S, 3D) f32
    valid = m_ref[...] > 0.5                                            # (1, S) key mask
    for hh in range(heads):                                             # static unroll
        q = (qkv[:, hh * dh:(hh + 1) * dh] * scale).astype(jnp.bfloat16)
        k = qkv[:, d + hh * dh:d + (hh + 1) * dh].astype(jnp.bfloat16)
        v = qkv[:, 2 * d + hh * dh:2 * d + (hh + 1) * dh].astype(jnp.bfloat16)
        sc = jnp.dot(q, k.T, preferred_element_type=jnp.float32)        # (S, S) f32
        sc = jnp.where(valid, sc, -1e30)
        sc = sc - jnp.max(sc, axis=-1, keepdims=True)
        p = jnp.exp(sc)
        p = p * _approx_recip(jnp.sum(p, axis=-1, keepdims=True))
        attn_sc[:, hh * dh:(hh + 1) * dh] = jnp.dot(p.astype(jnp.bfloat16), v,
                                                    preferred_element_type=jnp.float32)
    o = jnp.dot(attn_sc[...].astype(jnp.bfloat16), wo_ref[...],
                preferred_element_type=jnp.float32) + bo_ref[...]
    o_ref[...] = o.astype(o_ref.dtype)


def performer_attention(h_dense, mask_f, wqkv, bqkv, wo, bo, *, heads):
    bsz, s_len, d = h_dense.shape
    scale = float(d // heads) ** -0.5
    return pl.pallas_call(
        functools.partial(_attn_kernel, heads=heads, scale=scale),
        out_shape=jax.ShapeDtypeStruct((bsz, s_len, d), jnp.bfloat16),
        grid=(bsz,),
        in_specs=[
            pl.BlockSpec((None, s_len, d), lambda b: (b, 0, 0)),   # squeezed batch dim
            pl.BlockSpec((None, 1, s_len), lambda b: (b, 0, 0)),
            pl.BlockSpec((d, 3 * d), lambda b: (0, 0)),
            pl.BlockSpec((1, 3 * d), lambda b: (0, 0)),
            pl.BlockSpec((d, d), lambda b: (0, 0)),
            pl.BlockSpec((1, d), lambda b: (0, 0)),
        ],
        out_specs=pl.BlockSpec((None, s_len, d), lambda b: (b, 0, 0)),
        scratch_shapes=[pltpu.VMEM((s_len, d), jnp.float32)],
        compiler_params=_cparams("parallel"),
    )(h_dense, mask_f, wqkv, bqkv, wo, bo.reshape(1, d))


def _add3_kernel(xs_ref, ha_ref, z_ref, sa_ref, ta_ref, zo_ref, sum_ref, ssq_ref, *, tm, n_valid):
    """z_next = xs + h_attn + (z*sa + ta), fused with BN2 batch-statistic accumulation."""
    i = pl.program_id(0)
    h = z_ref[...].astype(jnp.float32) * sa_ref[...] + ta_ref[...]
    z = xs_ref[...].astype(jnp.float32) + ha_ref[...].astype(jnp.float32) + h
    rid = jax.lax.broadcasted_iota(jnp.int32, z.shape, 0) + i * tm
    z = jnp.where(rid < n_valid, z, 0.0)              # zero padded rows (keeps stats clean)
    zo_ref[...] = z.astype(zo_ref.dtype)

    @pl.when(i == 0)
    def _():
        sum_ref[...] = jnp.zeros_like(sum_ref)
        ssq_ref[...] = jnp.zeros_like(ssq_ref)

    sum_ref[...] += jnp.sum(z, axis=0, keepdims=True)
    ssq_ref[...] += jnp.sum(z * z, axis=0, keepdims=True)


def add3_stats(xs, h_attn, z, sa, ta, n_valid, *, tm):
    n, d = xs.shape
    return pl.pallas_call(
        functools.partial(_add3_kernel, tm=tm, n_valid=n_valid),
        out_shape=(jax.ShapeDtypeStruct((n, d), jnp.bfloat16),
                   jax.ShapeDtypeStruct((1, d), jnp.float32),
                   jax.ShapeDtypeStruct((1, d), jnp.float32)),
        grid=(n // tm,),
        in_specs=[pl.BlockSpec((tm, d), lambda i: (i, 0)),
                  pl.BlockSpec((tm, d), lambda i: (i, 0)),
                  pl.BlockSpec((tm, d), lambda i: (i, 0)),
                  pl.BlockSpec((1, d), lambda i: (0, 0)),
                  pl.BlockSpec((1, d), lambda i: (0, 0))],
        out_specs=(pl.BlockSpec((tm, d), lambda i: (i, 0)),
                   pl.BlockSpec((1, d), lambda i: (0, 0)),
                   pl.BlockSpec((1, d), lambda i: (0, 0))),
        compiler_params=_cparams("arbitrary"),
    )(xs, h_attn, z, sa, ta)


def _linear_kernel(x_ref, w_ref, b_ref, o_ref):
    y = jnp.dot(x_ref[...], w_ref[...], preferred_element_type=jnp.float32) + b_ref[...]
    o_ref[...] = y.astype(o_ref.dtype)


def linear(x, w, b2d, *, tm):
    n, din = x.shape
    dout = w.shape[1]
    return pl.pallas_call(
        _linear_kernel,
        out_shape=jax.ShapeDtypeStruct((n, dout), jnp.float32),
        grid=(n // tm,),
        in_specs=[pl.BlockSpec((tm, din), lambda i: (i, 0)),
                  pl.BlockSpec((din, dout), lambda i: (0, 0)),
                  pl.BlockSpec((1, dout), lambda i: (0, 0))],
        out_specs=pl.BlockSpec((tm, dout), lambda i: (i, 0)),
        compiler_params=_cparams("parallel"),
    )(x, w, b2d)


# ----------------------------- JAX glue -----------------------------

def build_adjacency(edge_index, n_pad):
    """A_count[i, j] = #edges j -> i (bf16, exact small ints), plus f32 1/deg and deg>0 indicator.

    Keeping the 1/deg scaling in f32 outside the bf16 adjacency stream keeps mean aggregation
    exact while halving the dominant O(N^2) DMA traffic.
    """
    src, dst = edge_index[0], edge_index[1]
    a = jnp.zeros((n_pad, n_pad), jnp.float32).at[dst, src].add(1.0)
    deg = a.sum(axis=1, keepdims=True)
    inv_deg = 1.0 / jnp.maximum(deg, 1.0)
    nbr = (deg > 0).astype(jnp.float32)
    return a.astype(jnp.bfloat16), inv_deg, nbr


def to_dense_batch(x, batch_vec, num_graphs, max_nodes):
    # TODO(synk): assumes batch_vec is sorted/contiguous per graph (same as PyG's to_dense_batch).
    n = x.shape[0]
    counts = jax.ops.segment_sum(jnp.ones((n,), jnp.int32), batch_vec, num_segments=num_graphs)
    starts = jnp.concatenate(
        [jnp.zeros((1,), jnp.int32), jnp.cumsum(counts)[:-1].astype(jnp.int32)])
    pos = jnp.arange(n, dtype=jnp.int32) - starts[batch_vec]
    dense = jnp.zeros((num_graphs, max_nodes, x.shape[1]), x.dtype).at[batch_vec, pos].set(x)
    mask = jnp.zeros((num_graphs, max_nodes), jnp.float32).at[batch_vec, pos].set(1.0)
    return dense, mask, (batch_vec, pos)


def bn_affine(ssum, ssq, gamma, beta, n_valid, sa=None, ta=None):
    """Per-column affine of torch BatchNorm1d (batch stats, biased var).

    Stats are given for z; if the true features are x = z*sa + ta (pending affine), the stats are
    shifted analytically: mean_x = mean_z*sa + ta, var_x = var_z*sa^2.
    """
    mean = ssum / n_valid
    var = ssq / n_valid - mean * mean
    if sa is not None:
        mean = mean * sa + ta
        var = var * sa * sa
    rstd = jax.lax.rsqrt(var + _EPS)
    s = gamma.reshape(1, -1) * rstd
    t = beta.reshape(1, -1) - mean * s
    return s, t


def forward(params, x_raw, edge_index, batch_vec, num_graphs, max_nodes):
    n = x_raw.shape[0]
    n_pad, tm, tk = _choose_tiles(n)
    d = params["pre_w"].shape[1]
    heads = params["heads"]
    s_len = _round_up(max(max_nodes, 8), 8)

    x_pad = jnp.zeros((n_pad, x_raw.shape[1]), jnp.bfloat16).at[:n].set(
        x_raw.astype(jnp.bfloat16))
    a_cnt, inv_deg, nbr_ind = build_adjacency(edge_index, n_pad)

    # FeatureEncoder (linear) + pre_mp (Linear + ReLU), fused, with first-layer BN stats emitted
    z, zsum, zssq = encoder_premp(x_pad, params["enc_w"], params["enc_b"],
                                  params["pre_w"], params["pre_b"], n, tm=tm)

    # Pending BN2 affine from the previous layer: true features x = z*sa + ta (identity at start).
    sa = jnp.ones((1, d), jnp.float32)
    ta = jnp.zeros((1, d), jnp.float32)
    nf = float(n)

    for lp in params["layers"]:
        # BN1 affine on x, derived analytically from z's stats + pending affine (no extra HBM pass)
        s1, t1 = bn_affine(zsum, zssq, lp["n1_g"], lp["n1_b"], nf, sa, ta)
        sc1, tc1 = sa * s1, ta * s1 + t1                    # same affine expressed on z

        # xs = SAGEConv(BN1(x), mean) + BN1(x)   (dropout = identity)
        xs = sage_conv_fused(z, a_cnt, inv_deg, nbr_ind, sc1, tc1,
                             lp["w_lr"], lp["b"], tm=tm, tk=tk)

        # Attention branch on h = x = z*sa + ta: fold the pending affine into the QKV projection.
        wqkv32 = lp["wqkv"].astype(jnp.float32)
        wqkv_f = (wqkv32 * sa.reshape(d, 1)).astype(jnp.bfloat16)
        bqkv = ta @ wqkv32                                  # (1, 3D)
        z_dense, mask, (bvec, pos) = to_dense_batch(z[:n], batch_vec, num_graphs, s_len)
        attn_dense = performer_attention(z_dense, mask.reshape(num_graphs, 1, s_len),
                                         wqkv_f, bqkv, lp["wo"], lp["bo"], heads=heads)
        h_attn = jnp.zeros((n_pad, d), jnp.bfloat16).at[:n].set(attn_dense[bvec, pos])

        # z_next = xs + h_attn + h, fused with BN2 batch stats; BN2 affine stays pending.
        z, zsum, zssq = add3_stats(xs, h_attn, z, sa, ta, n, tm=tm)
        sa, ta = bn_affine(zsum, zssq, lp["n2_g"], lp["n2_b"], nf)

    # post_mp node head on x = z*sa + ta: fold the pending affine into the head weights.
    wh32 = params["head_w"].astype(jnp.float32)
    wh = (wh32 * sa.reshape(d, 1)).astype(jnp.bfloat16)
    bh = params["head_b"].reshape(1, -1) + ta @ wh32
    out_pad = linear(z, wh, bh, tm=tm)
    return out_pad[:n, :params["d_out"]]


# ----------------------------- Parameters -----------------------------

def init_params(key, d_raw, d_hid, d_out, heads, layers_mp):
    def w(k, shape):
        return (0.1 * jax.random.normal(k, shape, jnp.float32)).astype(jnp.bfloat16)

    d_out_pad = _round_up(d_out, 128)
    keys = iter(jax.random.split(key, 4 + layers_mp * 8))

    head_w = 0.1 * jax.random.normal(next(keys), (d_hid, d_out), jnp.float32)
    head_w = jnp.zeros((d_hid, d_out_pad), jnp.float32).at[:, :d_out].set(head_w)

    params = {
        "heads": heads,
        "d_out": d_out,
        "enc_w": w(next(keys), (d_raw, d_hid)),
        "enc_b": jnp.zeros((d_hid,), jnp.float32),
        "pre_w": w(next(keys), (d_hid, d_hid)),
        "pre_b": jnp.zeros((d_hid,), jnp.float32),
        "head_w": head_w.astype(jnp.bfloat16),
        "head_b": jnp.zeros((d_out_pad,), jnp.float32),
        "layers": [],
    }
    for _ in range(layers_mp):
        wl = w(next(keys), (d_hid, d_hid))      # lin_l (neighbor aggregation)
        wr = w(next(keys), (d_hid, d_hid))      # lin_r (root)
        params["layers"].append({
            "n1_g": jnp.ones((d_hid,), jnp.float32),
            "n1_b": jnp.zeros((d_hid,), jnp.float32),
            "n2_g": jnp.ones((d_hid,), jnp.float32),
            "n2_b": jnp.zeros((d_hid,), jnp.float32),
            "w_lr": jnp.concatenate([wl, wr], axis=0),     # stacked -> single K=2D MXU matmul
            "b": jnp.zeros((d_hid,), jnp.float32),
            "wqkv": w(next(keys), (d_hid, 3 * d_hid)),     # performer to_qkv (no bias)
            "wo": w(next(keys), (d_hid, d_hid)),
            "bo": jnp.zeros((d_hid,), jnp.float32),
        })
    return params


# ----------------------------- Main -----------------------------

if __name__ == "__main__":
    num_graphs = 2
    nodes_per_graph = 8
    n_nodes = num_graphs * nodes_per_graph      # 16
    d_raw, d_hid, d_out = 128, 128, 8           # spec fixes dim_in = 128 (lane-dense)
    heads, layers_mp = 4, 2

    key = jax.random.PRNGKey(0)
    kx, kp = jax.random.split(key)
    x_raw = jax.random.normal(kx, (n_nodes, d_raw), jnp.float32)

    # deterministic bidirectional ring edges inside each graph
    srcs, dsts = [], []
    for g in range(num_graphs):
        off = g * nodes_per_graph
        for i in range(nodes_per_graph):
            j = (i + 1) % nodes_per_graph
            srcs += [off + i, off + j]
            dsts += [off + j, off + i]
    edge_index = jnp.array([srcs, dsts], jnp.int32)                   # (2, 32)
    batch_vec = jnp.repeat(jnp.arange(num_graphs, dtype=jnp.int32), nodes_per_graph)

    params = init_params(kp, d_raw, d_hid, d_out, heads, layers_mp)

    out = forward(params, x_raw, edge_index, batch_vec, num_graphs, nodes_per_graph)
    out = jax.block_until_ready(out)
    assert out.shape == (n_nodes, d_out) and bool(jnp.all(jnp.isfinite(out)))
    print("KERNEL_OK")
</pallas_src>

<mosaic_0001>
module attributes {stable_mosaic.version = 11 : i64} {
  func.func @_enc_kernel(%arg0: i32, %arg1: memref<16x128xbf16, #tpu.memory_space<vmem>>, %arg2: memref<128x128xbf16, #tpu.memory_space<vmem>>, %arg3: memref<1x128xf32, #tpu.memory_space<vmem>>, %arg4: memref<128x128xbf16, #tpu.memory_space<vmem>>, %arg5: memref<1x128xf32, #tpu.memory_space<vmem>>, %arg6: memref<16x128xbf16, #tpu.memory_space<vmem>>, %arg7: memref<1x128xf32, #tpu.memory_space<vmem>>, %arg8: memref<1x128xf32, #tpu.memory_space<vmem>>) attributes {dimension_semantics = [#tpu.dimension_semantics<arbitrary>], iteration_bounds = array<i64: 1>, scalar_prefetch = 0 : i64, scratch_operands = 0 : i64, tpu.core_type = #tpu.core_type<tc>, window_params = [{transform_indices = @transform_0, window_bounds = array<i64: 16, 128>}, {pipeline_mode = #tpu.pipeline_mode<synchronous>, transform_indices = @transform_1, window_bounds = array<i64: 128, 128>}, {pipeline_mode = #tpu.pipeline_mode<synchronous>, transform_indices = @transform_2, window_bounds = array<i64: 1, 128>}, {pipeline_mode = #tpu.pipeline_mode<synchronous>, transform_indices = @transform_3, window_bounds = array<i64: 128, 128>}, {pipeline_mode = #tpu.pipeline_mode<synchronous>, transform_indices = @transform_4, window_bounds = array<i64: 1, 128>}, {transform_indices = @transform_5, window_bounds = array<i64: 16, 128>}, {pipeline_mode = #tpu.pipeline_mode<synchronous>, transform_indices = @transform_6, window_bounds = array<i64: 1, 128>}, {pipeline_mode = #tpu.pipeline_mode<synchronous>, transform_indices = @transform_7, window_bounds = array<i64: 1, 128>}]} {
    %c0 = arith.constant 0 : index
    %c0_0 = arith.constant 0 : index
    %0 = vector.load %arg1[%c0, %c0_0] : memref<16x128xbf16, #tpu.memory_space<vmem>>, vector<16x128xbf16>
    %c0_1 = arith.constant 0 : index
    %c0_2 = arith.constant 0 : index
    %1 = vector.load %arg2[%c0_1, %c0_2] : memref<128x128xbf16, #tpu.memory_space<vmem>>, vector<128x128xbf16>
    %cst = arith.constant dense<0.000000e+00> : vector<16x128xf32>
    %2 = tpu.matmul %0, %1, %cst {dimension_numbers = #tpu.dot_dimension_numbers<[1], [0], [0], [1], [0, 0, 1, 1], [], []>} : vector<16x128xbf16>, vector<128x128xbf16>, vector<16x128xf32> -> vector<16x128xf32>
    %c0_3 = arith.constant 0 : index
    %c0_4 = arith.constant 0 : index
    %3 = vector.load %arg3[%c0_3, %c0_4] : memref<1x128xf32, #tpu.memory_space<vmem>>, vector<1x128xf32>
    %4 = vector.broadcast %3 : vector<1x128xf32> to vector<16x128xf32>
    %5 = arith.addf %2, %4 : vector<16x128xf32>
    %6 = arith.truncf %5 : vector<16x128xf32> to vector<16x128xbf16>
    %c0_5 = arith.constant 0 : index
    %c0_6 = arith.constant 0 : index
    %7 = vector.load %arg4[%c0_5, %c0_6] : memref<128x128xbf16, #tpu.memory_space<vmem>>, vector<128x128xbf16>
    %cst_7 = arith.constant dense<0.000000e+00> : vector<16x128xf32>
    %8 = tpu.matmul %6, %7, %cst_7 {dimension_numbers = #tpu.dot_dimension_numbers<[1], [0], [0], [1], [0, 0, 1, 1], [], []>} : vector<16x128xbf16>, vector<128x128xbf16>, vector<16x128xf32> -> vector<16x128xf32>
    %c0_8 = arith.constant 0 : index
    %c0_9 = arith.constant 0 : index
    %9 = vector.load %arg5[%c0_8, %c0_9] : memref<1x128xf32, #tpu.memory_space<vmem>>, vector<1x128xf32>
    %10 = vector.broadcast %9 : vector<1x128xf32> to vector<16x128xf32>
    %11 = arith.addf %8, %10 : vector<16x128xf32>
    %cst_10 = arith.constant 0.000000e+00 : f32
    %12 = vector.broadcast %cst_10 : f32 to vector<16x128xf32>
    %13 = arith.maximumf %11, %12 : vector<16x128xf32>
    %14 = arith.truncf %13 : vector<16x128xf32> to vector<16x128xbf16>
    %c0_11 = arith.constant 0 : index
    %c0_12 = arith.constant 0 : index
    %15 = vector.load %arg6[%c0_11, %c0_12] : memref<16x128xbf16, #tpu.memory_space<vmem>>, vector<16x128xbf16>
    tpu.vector_store %arg6[%c0_11, %c0_12], %14 {strides = array<i32>} : memref<16x128xbf16, #tpu.memory_space<vmem>>, vector<16x128xbf16>,
    %16 = tpu.iota {dimensions = array<i32: 0>} : vector<16x128xi32>
    %c16_i32 = arith.constant 16 : i32
    %17 = arith.muli %arg0, %c16_i32 : i32
    %18 = vector.broadcast %17 : i32 to vector<16x128xi32>
    %19 = arith.addi %16, %18 : vector<16x128xi32>
    %c16_i32_13 = arith.constant 16 : i32
    %20 = vector.broadcast %c16_i32_13 : i32 to vector<16x128xi32>
    %21 = arith.cmpi slt, %19, %20 : vector<16x128xi32>
    %cst_14 = arith.constant 0.000000e+00 : f32
    %22 = vector.broadcast %cst_14 : f32 to vector<16x128xf32>
    %23 = arith.select %21, %13, %22 : vector<16x128xi1>, vector<16x128xf32>
    %c0_i32 = arith.constant 0 : i32
    %24 = arith.cmpi eq, %arg0, %c0_i32 : i32
    %25 = arith.extui %24 : i1 to i32
    %c0_i32_15 = arith.constant 0 : i32
    %26 = arith.cmpi ne, %25, %c0_i32_15 : i32
    scf.if %26 {
      %cst_26 = arith.constant 0.000000e+00 : f32
      %38 = vector.broadcast %cst_26 : f32 to vector<1x128xf32>
      %c0_27 = arith.constant 0 : index
      %c0_28 = arith.constant 0 : index
      %39 = vector.load %arg7[%c0_27, %c0_28] : memref<1x128xf32, #tpu.memory_space<vmem>>, vector<1x128xf32>
      tpu.vector_store %arg7[%c0_27, %c0_28], %38 {strides = array<i32>} : memref<1x128xf32, #tpu.memory_space<vmem>>, vector<1x128xf32>,
      %cst_29 = arith.constant 0.000000e+00 : f32
      %40 = vector.broadcast %cst_29 : f32 to vector<1x128xf32>
      %c0_30 = arith.constant 0 : index
      %c0_31 = arith.constant 0 : index
      %41 = vector.load %arg8[%c0_30, %c0_31] : memref<1x128xf32, #tpu.memory_space<vmem>>, vector<1x128xf32>
      tpu.vector_store %arg8[%c0_30, %c0_31], %40 {strides = array<i32>} : memref<1x128xf32, #tpu.memory_space<vmem>>, vector<1x128xf32>,
    } else {
    }
    %c0_16 = arith.constant 0 : index
    %c0_17 = arith.constant 0 : index
    %27 = vector.load %arg7[%c0_16, %c0_17] : memref<1x128xf32, #tpu.memory_space<vmem>>, vector<1x128xf32>
    %cst_18 = arith.constant dense<0.000000e+00> : vector<128xf32>
    %28 = vector.multi_reduction <add>, %23, %cst_18 [0] : vector<16x128xf32> to vector<128xf32>
    %29 = vector.shape_cast %28 : vector<128xf32> to vector<1x128xf32>
    %30 = arith.addf %27, %29 : vector<1x128xf32>
    %c0_19 = arith.constant 0 : index
    %c0_20 = arith.constant 0 : index
    %31 = vector.load %arg7[%c0_19, %c0_20] : memref<1x128xf32, #tpu.memory_space<vmem>>, vector<1x128xf32>
    tpu.vector_store %arg7[%c0_19, %c0_20], %30 {strides = array<i32>} : memref<1x128xf32, #tpu.memory_space<vmem>>, vector<1x128xf32>,
    %c0_21 = arith.constant 0 : index
    %c0_22 = arith.constant 0 : index
    %32 = vector.load %arg8[%c0_21, %c0_22] : memref<1x128xf32, #tpu.memory_space<vmem>>, vector<1x128xf32>
    %33 = arith.mulf %23, %23 : vector<16x128xf32>
    %cst_23 = arith.constant dense<0.000000e+00> : vector<128xf32>
    %34 = vector.multi_reduction <add>, %33, %cst_23 [0] : vector<16x128xf32> to vector<128xf32>
    %35 = vector.shape_cast %34 : vector<128xf32> to vector<1x128xf32>
    %36 = arith.addf %32, %35 : vector<1x128xf32>
    %c0_24 = arith.constant 0 : index
    %c0_25 = arith.constant 0 : index
    %37 = vector.load %arg8[%c0_24, %c0_25] : memref<1x128xf32, #tpu.memory_space<vmem>>, vector<1x128xf32>
    tpu.vector_store %arg8[%c0_24, %c0_25], %36 {strides = array<i32>} : memref<1x128xf32, #tpu.memory_space<vmem>>, vector<1x128xf32>,
    return
  }
  func.func @transform_0(%arg0: i32) -> (i32, i32) {
    %c0_i32 = arith.constant 0 : i32
    %c0_i32_0 = arith.constant 0 : i32
    return %arg0, %c0_i32 : i32, i32
  }
  func.func @transform_1(%arg0: i32) -> (i32, i32) {
    %c0_i32 = arith.constant 0 : i32
    %c0_i32_0 = arith.constant 0 : i32
    %c0_i32_1 = arith.constant 0 : i32
    return %c0_i32, %c0_i32_0 : i32, i32
  }
  func.func @transform_2(%arg0: i32) -> (i32, i32) {
    %c0_i32 = arith.constant 0 : i32
    %c0_i32_0 = arith.constant 0 : i32
    %c0_i32_1 = arith.constant 0 : i32
    return %c0_i32, %c0_i32_0 : i32, i32
  }
  func.func @transform_3(%arg0: i32) -> (i32, i32) {
    %c0_i32 = arith.constant 0 : i32
    %c0_i32_0 = arith.constant 0 : i32
    %c0_i32_1 = arith.constant 0 : i32
    return %c0_i32, %c0_i32_0 : i32, i32
  }
  func.func @transform_4(%arg0: i32) -> (i32, i32) {
    %c0_i32 = arith.constant 0 : i32
    %c0_i32_0 = arith.constant 0 : i32
    %c0_i32_1 = arith.constant 0 : i32
    return %c0_i32, %c0_i32_0 : i32, i32
  }
  func.func @transform_5(%arg0: i32) -> (i32, i32) {
    %c0_i32 = arith.constant 0 : i32
    %c0_i32_0 = arith.constant 0 : i32
    return %arg0, %c0_i32 : i32, i32
  }
  func.func @transform_6(%arg0: i32) -> (i32, i32) {
    %c0_i32 = arith.constant 0 : i32
    %c0_i32_0 = arith.constant 0 : i32
    %c0_i32_1 = arith.constant 0 : i32
    return %c0_i32, %c0_i32_0 : i32, i32
  }
  func.func @transform_7(%arg0: i32) -> (i32, i32) {
    %c0_i32 = arith.constant 0 : i32
    %c0_i32_0 = arith.constant 0 : i32
    %c0_i32_1 = arith.constant 0 : i32
    return %c0_i32, %c0_i32_0 : i32, i32
  }
}

</mosaic_0001>

<llo_original>
// kernel: tpu_custom_call.1
$region0: #{tpu_custom_call.1}
  #allocation0 [shape = 'u32[]', space=smem, size = 0x4, offset = 0x4, fixed_abs, tag = 'smem constant byte address 0x4 - core index']
  #allocation1 [shape = 'u32[72,128]{1,0:T(1,128)}', space=vmem, size = 0x9000, scoped, tag = 'internal scratch']
  %s0 = inlined_call_operand.hbm [shape: bf16[16,128], index: 0, kind: input, shape index: {}]
  %s1 = inlined_call_operand.hbm [shape: bf16[128,128], index: 1, kind: input, shape index: {}]
  %s2 = inlined_call_operand.vmem [shape: f32[1,128], index: 2, kind: input, shape index: {}]
  %s3 = inlined_call_operand.hbm [shape: bf16[128,128], index: 3, kind: input, shape index: {}]
  %s4 = inlined_call_operand.vmem [shape: f32[1,128], index: 4, kind: input, shape index: {}]
  %s5 = inlined_call_operand.hbm [shape: bf16[16,128], index: 5, kind: output, shape index: {0}]
  %s6 = inlined_call_operand.hbm [shape: f32[1,128], index: 6, kind: output, shape index: {1}]
  %s7 = inlined_call_operand.hbm [shape: f32[1,128], index: 7, kind: output, shape index: {2}]
  %8 = xla_tuple %s5, %s6, %s7
  %s9 = sld [smem:[#allocation0]]
  $region62: #{tpu_custom_call.1} parent=0
    _
  %s11 = ssub.s32 1, %s9
  %s12 = scalar_select 0, %s11, %s9
  $region1: #{tpu_custom_call.1} parent=0
    #allocation2 [shape = 'u8[4096]{0}', space=vmem, size = 0x1000, scoped, tag = 'input window, operand 0, single buffered']
    #allocation3 [shape = 's32[1]{0}', space=sflag, size = 0x4, scoped, tag = 'scoped memory for tpu_custom_call.1']
    #allocation4 [shape = 's32[1]{0}', space=sflag, size = 0x4, scoped, tag = 'scoped memory for tpu_custom_call.1']
    #allocation5 [shape = 'u8[32768]{0}', space=vmem, size = 0x8000, scoped, tag = 'input window, operand 1, single buffered']
    #allocation6 [shape = 's32[1]{0}', space=sflag, size = 0x4, scoped, tag = 'scoped memory for tpu_custom_call.1']
    #allocation7 [shape = 'u8[32768]{0}', space=vmem, size = 0x8000, scoped, tag = 'input window, operand 3, single buffered']
    #allocation8 [shape = 'u8[4096]{0}', space=vmem, size = 0x1000, scoped, tag = 'output window, operand 0, single buffered']
    #allocation9 [shape = 'u8[512]{0}', space=vmem, size = 0x400, scoped, tag = 'output window, operand 1, single buffered']
    #allocation10 [shape = 's32[1]{0}', space=sflag, size = 0x4, scoped, tag = 'scoped memory for tpu_custom_call.1']
    #allocation11 [shape = 'u8[512]{0}', space=vmem, size = 0x400, scoped, tag = 'output window, operand 2, single buffered']
    %13 = vsyncpa [#allocation3], 0
    %14 = vsyncpa [#allocation6], 0
    %15 = vsyncpa [#allocation4], 0
    %16 = vsyncpa [#allocation10], 0
    // Predicated region
    $region2: #{tpu_custom_call.1} parent=1 // pred_check
      _
    $region3: #{tpu_custom_call.1} parent=1 // pred_check_branch
      %18 = sbr.rel (0) target = $region5
    $region4: #{tpu_custom_call.1} parent=1 // pred_region
      %20 = vsyncadd [#allocation3], 0
      %s21 = sshll.u32 %s0, 4
      %s22 = int_to_ptr.hbm [resolvable:$true] %s21
      %s23 = sshll.u32 [#allocation2], 4
      %s24 = int_to_ptr.vmem [resolvable:$true] %s23
      %29 = dma.hbm_to_vmem [thread:$0]  %s22, 128, %s24, [#allocation3], 64, 64, 4
    $region5: #{tpu_custom_call.1} parent=1 // pred_fallthru
      _
    // Predicated region
    $region6: #{tpu_custom_call.1} parent=1 // pred_check
      _
    $region7: #{tpu_custom_call.1} parent=1 // pred_check_branch
      %31 = sbr.rel (0) target = $region9
    $region8: #{tpu_custom_call.1} parent=1 // pred_region
      %33 = vsyncadd [#allocation6], 0
      %s34 = sshll.u32 %s1, 4
      %s35 = int_to_ptr.hbm [resolvable:$true] %s34
      %s36 = sshll.u32 [#allocation5], 4
      %s37 = int_to_ptr.vmem [resolvable:$true] %s36
      %42 = dma.hbm_to_vmem [thread:$0]  %s35, 1024, %s37, [#allocation6], 64, 64, 4
    $region9: #{tpu_custom_call.1} parent=1 // pred_fallthru
      _
    // Predicated region
    $region10: #{tpu_custom_call.1} parent=1 // pred_check
      _
    $region11: #{tpu_custom_call.1} parent=1 // pred_check_branch
      %44 = sbr.rel (0) target = $region13
    $region12: #{tpu_custom_call.1} parent=1 // pred_region
      _
    $region13: #{tpu_custom_call.1} parent=1 // pred_fallthru
      _
    // Predicated region
    $region14: #{tpu_custom_call.1} parent=1 // pred_check
      _
    $region15: #{tpu_custom_call.1} parent=1 // pred_check_branch
      %46 = sbr.rel (0) target = $region17
    $region16: #{tpu_custom_call.1} parent=1 // pred_region
      %48 = vsyncadd [#allocation6], 0
      %s49 = sshll.u32 %s3, 4
      %s50 = int_to_ptr.hbm [resolvable:$true] %s49
      %s51 = sshll.u32 [#allocation7], 4
      %s52 = int_to_ptr.vmem [resolvable:$true] %s51
      %57 = dma.hbm_to_vmem [thread:$0]  %s50, 1024, %s52, [#allocation6], 64, 64, 4
    $region17: #{tpu_custom_call.1} parent=1 // pred_fallthru
      _
    // Predicated region
    $region18: #{tpu_custom_call.1} parent=1 // pred_check
      _
    $region19: #{tpu_custom_call.1} parent=1 // pred_check_branch
      %59 = sbr.rel (0) target = $region21
    $region20: #{tpu_custom_call.1} parent=1 // pred_region
      _
    $region21: #{tpu_custom_call.1} parent=1 // pred_fallthru
      _
    // Predicated region
    $region22: #{tpu_custom_call.1} parent=1 // pred_check
      _
    $region23: #{tpu_custom_call.1} parent=1 // pred_check_branch
      %61 = sbr.rel (0) target = $region25
    $region24: #{tpu_custom_call.1} parent=1 // pred_region
      %63 = dma.done [#allocation3], 128
    $region25: #{tpu_custom_call.1} parent=1 // pred_fallthru
      _
    // Predicated region
    $region26: #{tpu_custom_call.1} parent=1 // pred_check
      _
    $region27: #{tpu_custom_call.1} parent=1 // pred_check_branch
      %65 = sbr.rel (0) target = $region29
    $region28: #{tpu_custom_call.1} parent=1 // pred_region
      %67 = dma.done [#allocation6], 1024
    $region29: #{tpu_custom_call.1} parent=1 // pred_fallthru
      _
    // Predicated region
    $region30: #{tpu_custom_call.1} parent=1 // pred_check
      _
    $region31: #{tpu_custom_call.1} parent=1 // pred_check_branch
      %69 = sbr.rel (0) target = $region33
    $region32: #{tpu_custom_call.1} parent=1 // pred_region
      %71 = dma.done [#allocation6], 1024
    $region33: #{tpu_custom_call.1} parent=1 // pred_fallthru
      _
    %v72 = vld [vmem:[#allocation2] sm:$0xf]
    %v73 = vld [vmem:[#allocation2 + $0x4] sm:$0xf]
    %v74 = vld [vmem:[#allocation5] sm:$0xf]
    %v75 = vld [vmem:[#allocation5 + $0x4] sm:$0xf]
    %v76 = vld [vmem:[#allocation5 + $0x8] sm:$0xf]
    %v77 = vld [vmem:[#allocation5 + $0xc] sm:$0xf]
    %v78 = vld [vmem:[#allocation5 + $0x10] sm:$0xf]
    %v79 = vld [vmem:[#allocation5 + $0x14] sm:$0xf]
    %v80 = vld [vmem:[#allocation5 + $0x18] sm:$0xf]
    %v81 = vld [vmem:[#allocation5 + $0x1c] sm:$0xf]
    %v82 = vld [vmem:[#allocation5 + $0x20] sm:$0xf]
    %v83 = vld [vmem:[#allocation5 + $0x24] sm:$0xf]
    %v84 = vld [vmem:[#allocation5 + $0x28] sm:$0xf]
    %v85 = vld [vmem:[#allocation5 + $0x2c] sm:$0xf]
    %v86 = vld [vmem:[#allocation5 + $0x30] sm:$0xf]
    %v87 = vld [vmem:[#allocation5 + $0x34] sm:$0xf]
    %v88 = vld [vmem:[#allocation5 + $0x38] sm:$0xf]
    %v89 = vld [vmem:[#allocation5 + $0x3c] sm:$0xf]
    %v90 = vld [vmem:[%s2] sm:$0x1]
    %v92 = vperm.slane %v90, 0
    %v96 = vunpack.c.l.b16 %v72
    %v97 = vunpack.c.l.b16 %v73
    %v98 = vpack.c.b16 %v97, %v96
    %v116 = vunpack.c.l.b16 %v74
    %v117 = vunpack.c.l.b16 %v75
    %v118 = vunpack.c.l.b16 %v76
    %v119 = vunpack.c.l.b16 %v77
    %v120 = vunpack.c.l.b16 %v78
    %v121 = vunpack.c.l.b16 %v79
    %v122 = vunpack.c.l.b16 %v80
    %v123 = vunpack.c.l.b16 %v81
    %v124 = vunpack.c.l.b16 %v82
    %v125 = vunpack.c.l.b16 %v83
    %v126 = vunpack.c.l.b16 %v84
    %v127 = vunpack.c.l.b16 %v85
    %v128 = vunpack.c.l.b16 %v86
    %v129 = vunpack.c.l.b16 %v87
    %v130 = vunpack.c.l.b16 %v88
    %v131 = vunpack.c.l.b16 %v89
    %v132 = vpack.c.b16 %v117, %v116
    %v133 = vpack.c.b16 %v119, %v118
    %v134 = vpack.c.b16 %v121, %v120
    %v135 = vpack.c.b16 %v123, %v122
    %v136 = vpack.c.b16 %v125, %v124
    %v137 = vpack.c.b16 %v127, %v126
    %v138 = vpack.c.b16 %v129, %v128
    %v139 = vpack.c.b16 %v131, %v130
    %148 = vmatpush.bf16.msra.mxu0 %v139
    %149 = vmatpush.bf16.msra.mxu0 %v138
    %150 = vmatpush.bf16.msra.mxu0 %v137
    %151 = vmatpush.bf16.msra.mxu0 %v136
    %152 = vmatpush.bf16.msra.mxu0 %v135
    %153 = vmatpush.bf16.msra.mxu0 %v134
    %154 = vmatpush.bf16.msra.mxu0 %v133
    %155 = vmatpush.bf16.msra.mxu0 %v132
    %156 = vmatmul.bf16.gmra.mxu0 %v98
    %v157 = vpop.f32.mrf.mxu0
    %v158 = vadd.f32 %v92, %v157
    %v159 = vpop.f32.mrf.mxu0
    %v160 = vadd.f32 %v92, %v159
    %161 = vdwg.mxu0
    %v162 = vpack.c.bf16 %v160, %v158
    %v163 = vld [vmem:[#allocation7] sm:$0xf]
    %v164 = vld [vmem:[#allocation7 + $0x4] sm:$0xf]
    %v165 = vld [vmem:[#allocation7 + $0x8] sm:$0xf]
    %v166 = vld [vmem:[#allocation7 + $0xc] sm:$0xf]
    %v167 = vld [vmem:[#allocation7 + $0x10] sm:$0xf]
    %v168 = vld [vmem:[#allocation7 + $0x14] sm:$0xf]
    %v169 = vld [vmem:[#allocation7 + $0x18] sm:$0xf]
    %v170 = vld [vmem:[#allocation7 + $0x1c] sm:$0xf]
    %v171 = vld [vmem:[#allocation7 + $0x20] sm:$0xf]
    %v172 = vld [vmem:[#allocation7 + $0x24] sm:$0xf]
    %v173 = vld [vmem:[#allocation7 + $0x28] sm:$0xf]
    %v174 = vld [vmem:[#allocation7 + $0x2c] sm:$0xf]
    %v175 = vld [vmem:[#allocation7 + $0x30] sm:$0xf]
    %v176 = vld [vmem:[#allocation7 + $0x34] sm:$0xf]
    %v177 = vld [vmem:[#allocation7 + $0x38] sm:$0xf]
    %v178 = vld [vmem:[#allocation7 + $0x3c] sm:$0xf]
    %v179 = vld [vmem:[%s4] sm:$0x1]
    %v181 = vperm.slane %v179, 0
    %v199 = vunpack.c.l.b16 %v163
    %v200 = vunpack.c.l.b16 %v164
    %v201 = vunpack.c.l.b16 %v165
    %v202 = vunpack.c.l.b16 %v166
    %v203 = vunpack.c.l.b16 %v167
    %v204 = vunpack.c.l.b16 %v168
    %v205 = vunpack.c.l.b16 %v169
    %v206 = vunpack.c.l.b16 %v170
    %v207 = vunpack.c.l.b16 %v171
    %v208 = vunpack.c.l.b16 %v172
    %v209 = vunpack.c.l.b16 %v173
    %v210 = vunpack.c.l.b16 %v174
    %v211 = vunpack.c.l.b16 %v175
    %v212 = vunpack.c.l.b16 %v176
    %v213 = vunpack.c.l.b16 %v177
    %v214 = vunpack.c.l.b16 %v178
    %v215 = vpack.c.b16 %v200, %v199
    %v216 = vpack.c.b16 %v202, %v201
    %v217 = vpack.c.b16 %v204, %v203
    %v218 = vpack.c.b16 %v206, %v205
    %v219 = vpack.c.b16 %v208, %v207
    %v220 = vpack.c.b16 %v210, %v209
    %v221 = vpack.c.b16 %v212, %v211
    %v222 = vpack.c.b16 %v214, %v213
    %231 = vmatpush.bf16.msra.mxu0 %v222
    %232 = vmatpush.bf16.msra.mxu0 %v221
    %233 = vmatpush.bf16.msra.mxu0 %v220
    %234 = vmatpush.bf16.msra.mxu0 %v219
    %235 = vmatpush.bf16.msra.mxu0 %v218
    %236 = vmatpush.bf16.msra.mxu0 %v217
    %237 = vmatpush.bf16.msra.mxu0 %v216
    %238 = vmatpush.bf16.msra.mxu0 %v215
    %239 = vmatmul.bf16.gmra.mxu0 %v162
    %v240 = vpop.f32.mrf.mxu0
    %v241 = vadd.f32 %v181, %v240
    %v242 = vpop.f32.mrf.mxu0
    %v243 = vadd.f32 %v181, %v242
    %244 = vdwg.mxu0
    %v245 = vmax.f32 %v241, 0.0
    %v246 = vmax.f32 %v243, 0.0
    %v247 = vpack.c.bf16 %v245, %v245
    %v248 = vpack.c.bf16 %v246, %v246
    %249 = vst [vmem:[#allocation8] sm:$0xf] %v247
    %250 = vst [vmem:[#allocation8 + $0x4] sm:$0xf] %v248
    %v251 = vlaneseq
    %v252 = vshrl.u32 %v251, 7
    %v253 = vadd.s32 %v252, 8
    %s254 = smul.u32 0, 16
    %v255 = vstv %s254
    %v256 = vadd.s32 %v252, %v255
    %v257 = vadd.s32 %v253, %v255
    %vm258 = vcmp.lt.s32.totalorder %v256, 16
    %vm259 = vcmp.lt.s32.totalorder %v257, 16
    %v260 = vsel %vm258, %v245, 0.0
    %v261 = vsel %vm259, %v246, 0.0
    %p262 = scmp.eq.s32.totalorder 0, 0
    // Predicated region
    $region34: #{tpu_custom_call.1} parent=1 // pred_check
      %p263 = pneg %p262
    $region35: #{tpu_custom_call.1} parent=1 // pred_check_branch
      %265 = sbr.rel (%p263) target = $region37
    $region36: #{tpu_custom_call.1} parent=1 // pred_region
      %266 = vst [vmem:[#allocation9] sm:$0x1] 0.0
      %267 = vst [vmem:[#allocation11] sm:$0x1] 0.0
    $region37: #{tpu_custom_call.1} parent=1 // pred_fallthru
      _
    %v268 = vld [vmem:[#allocation9] sm:$0x1]
    %v269 = vadd.f32 %v260, %v261
    %v270 = vrot.slane %v269, 4
    %v271 = vadd.f32 %v269, %v270
    %v272 = vrot.slane %v271, 2
    %v273 = vadd.f32 %v271, %v272
    %v274 = vrot.slane %v273, 1
    %v275 = vadd.f32 %v273, %v274
    %v276 = vadd.f32 %v268, %v275
    %277 = vst [vmem:[#allocation9] sm:$0x1] %v276
    %v278 = vld [vmem:[#allocation11] sm:$0x1]
    %v279 = vmul.f32 %v260, %v260
    %v280 = vmul.f32 %v261, %v261
    %v281 = vadd.f32 %v279, %v280
    %v282 = vrot.slane %v281, 4
    %v283 = vadd.f32 %v281, %v282
    %v284 = vrot.slane %v283, 2
    %v285 = vadd.f32 %v283, %v284
    %v286 = vrot.slane %v285, 1
    %v287 = vadd.f32 %v285, %v286
    %v288 = vadd.f32 %v278, %v287
    %289 = vst [vmem:[#allocation11] sm:$0x1] %v288
    // Predicated region
    $region38: #{tpu_custom_call.1} parent=1 // pred_check
      _
    $region39: #{tpu_custom_call.1} parent=1 // pred_check_branch
      %291 = sbr.rel (0) target = $region41
    $region40: #{tpu_custom_call.1} parent=1 // pred_region
      %293 = vsyncadd [#allocation4], 0
      %s294 = sshll.u32 [#allocation8], 4
      %s295 = int_to_ptr.vmem [resolvable:$true] %s294
      %s296 = sshll.u32 %s5, 4
      %s297 = int_to_ptr.hbm [resolvable:$true] %s296
      %302 = dma.vmem_to_hbm [thread:$0]  %s295, 128, %s297, [#allocation4], 64, 64, 4
    $region41: #{tpu_custom_call.1} parent=1 // pred_fallthru
      _
    // Predicated region
    $region42: #{tpu_custom_call.1} parent=1 // pred_check
      _
    $region43: #{tpu_custom_call.1} parent=1 // pred_check_branch
      %304 = sbr.rel (0) target = $region45
    $region44: #{tpu_custom_call.1} parent=1 // pred_region
      %306 = vsyncadd [#allocation10], 0
      %s308 = sshll.u32 [#allocation9], 4
      %s309 = int_to_ptr.vmem [resolvable:$true] %s308
      %s310 = sshll.u32 %s6, 4
      %s311 = int_to_ptr.hbm [resolvable:$true] %s310
      %313 = dma.vmem_to_hbm [thread:$0]  %s309, 16, %s311, [#allocation10]
    $region45: #{tpu_custom_call.1} parent=1 // pred_fallthru
      _
    // Predicated region
    $region46: #{tpu_custom_call.1} parent=1 // pred_check
      _
    $region47: #{tpu_custom_call.1} parent=1 // pred_check_branch
      %315 = sbr.rel (0) target = $region49
    $region48: #{tpu_custom_call.1} parent=1 // pred_region
      %317 = vsyncadd [#allocation10], 0
      %s319 = sshll.u32 [#allocation11], 4
      %s320 = int_to_ptr.vmem [resolvable:$true] %s319
      %s321 = sshll.u32 %s7, 4
      %s322 = int_to_ptr.hbm [resolvable:$true] %s321
      %324 = dma.vmem_to_hbm [thread:$0]  %s320, 16, %s322, [#allocation10]
    $region49: #{tpu_custom_call.1} parent=1 // pred_fallthru
      _
    // Predicated region
    $region50: #{tpu_custom_call.1} parent=1 // pred_check
      _
    $region51: #{tpu_custom_call.1} parent=1 // pred_check_branch
      %326 = sbr.rel (0) target = $region53
    $region52: #{tpu_custom_call.1} parent=1 // pred_region
      %328 = dma.done [#allocation4], 128
    $region53: #{tpu_custom_call.1} parent=1 // pred_fallthru
      _
    // Predicated region
    $region54: #{tpu_custom_call.1} parent=1 // pred_check
      _
    $region55: #{tpu_custom_call.1} parent=1 // pred_check_branch
      %330 = sbr.rel (0) target = $region57
    $region56: #{tpu_custom_call.1} parent=1 // pred_region
      %332 = dma.done [#allocation10], 16
    $region57: #{tpu_custom_call.1} parent=1 // pred_fallthru
      _
    // Predicated region
    $region58: #{tpu_custom_call.1} parent=1 // pred_check
      _
    $region59: #{tpu_custom_call.1} parent=1 // pred_check_branch
      %334 = sbr.rel (0) target = $region61
    $region60: #{tpu_custom_call.1} parent=1 // pred_region
      %336 = dma.done [#allocation10], 16
    $region61: #{tpu_custom_call.1} parent=1 // pred_fallthru
      _
    %337 = vsyncpa [#allocation3], 1
    %338 = vsyncpa [#allocation6], 1
    %339 = vsyncpa [#allocation4], 1
    %340 = vsyncpa [#allocation10], 1

</llo_original>
